<compile_context>
chip_gen: v7x
topology: tpu7x:2x2x1
jax: 0.10.0
libtpu: 0.0.40
codegen_flags: <defaults>
</compile_context>

<pallas_src>
import functools

import jax
import jax.numpy as jnp
from jax.experimental import pallas as pl
from jax.experimental.pallas import tpu as pltpu


def _round_up(n, m):
    return ((n + m - 1) // m) * m


def _pad_to(arr, shape):
    pads = [(0, t - s) for s, t in zip(arr.shape, shape)]
    if all(p == (0, 0) for p in pads):
        return arr
    return jnp.pad(arr, pads)


def mlp_sketch_kernel(x_ref, w0_ref, b0_ref, w1_ref, b1_ref,
                      wout_ref, bout_ref, out_ref, *, valid_out, mxu_dtype):
    x = x_ref[...]
    if x.dtype != mxu_dtype:
        x = x.astype(mxu_dtype)

    # input SketchLinear with the sketch pre-fused: h = relu(x @ (S0@W0) + b0)
    h = jnp.dot(x, w0_ref[...], preferred_element_type=jnp.float32) + b0_ref[...]
    h = jnp.maximum(h, 0.0)

    # hidden SketchLinear (sketch pre-fused); the reference applies ReLU only
    # AFTER the hidden-layer loop, so only one activation here.
    if mxu_dtype != jnp.float32:
        h = h.astype(mxu_dtype)
    h = jnp.dot(h, w1_ref[...], preferred_element_type=jnp.float32) + b1_ref[...]
    h = jnp.maximum(h, 0.0)

    # output nn.Linear
    if mxu_dtype != jnp.float32:
        h = h.astype(mxu_dtype)
    y = jnp.dot(h, wout_ref[...], preferred_element_type=jnp.float32) + bout_ref[...]

    # mask lane-padded output columns so they don't pollute the softmax
    lane = jax.lax.broadcasted_iota(jnp.int32, y.shape, 1)
    y = jnp.where(lane < valid_out, y, jnp.float32(-1e30))

    # log_softmax (the reference applies it twice, but the second application
    # is mathematically the identity, so it is dropped for performance)
    m = jnp.max(y, axis=-1, keepdims=True)
    e = jnp.exp(y - m)
    y = y - m - jnp.log(jnp.sum(e, axis=-1, keepdims=True))
    out_ref[...] = y.astype(out_ref.dtype)


def mlp_sketch_forward(x, params, *, tile_m=None, mxu_dtype=jnp.float32):
    """x: (B, dim_in) float32. params: dict of (in, out)-layout weights."""
    B, dim_in = x.shape
    h0 = params["w0"].shape[1]
    h1 = params["w1"].shape[1]
    dim_out = params["w_out"].shape[1]

    # ---- host-side algebraic fusion: (x @ S) @ W == x @ (S @ W)
    w0f = params["s0"] @ params["w0"]          # (dim_in, h0)
    w1f = params["s1"] @ params["w1"]          # (h0, h1)

    # ---- lane-dense zero padding (200 -> 256, 10 -> 128); padded bias entries
    # and padded weight rows are exactly zero so downstream math is unchanged.
    h0p = _round_up(h0, 128)
    h1p = _round_up(h1, 128)
    dop = _round_up(dim_out, 128)
    w0f = _pad_to(w0f, (dim_in, h0p))
    b0 = _pad_to(params["b0"], (1, h0p))
    w1f = _pad_to(w1f, (h0p, h1p))
    b1 = _pad_to(params["b1"], (1, h1p))
    wout = _pad_to(params["w_out"], (h1p, dop))
    bout = _pad_to(params["b_out"], (1, dop))

    if mxu_dtype != jnp.float32:
        w0f, w1f, wout = (a.astype(mxu_dtype) for a in (w0f, w1f, wout))

    # ---- batch tiling: one big tile for small B; 256-row tiles for large B so
    # per-step overhead amortizes and multi-step grids shard across v7x cores.
    if tile_m is None:
        tile_m = min(256, _round_up(B, 8))
    Bp = _round_up(B, tile_m)
    if Bp != B:
        x = _pad_to(x, (Bp, dim_in))

    def full(arr):
        # whole-array block, resident for every grid step
        return pl.BlockSpec(arr.shape, lambda i: (0,) * arr.ndim)

    kernel = functools.partial(
        mlp_sketch_kernel, valid_out=dim_out, mxu_dtype=mxu_dtype)

    grid_spec = pltpu.PrefetchScalarGridSpec(
        num_scalar_prefetch=0,
        grid=(Bp // tile_m,),
        in_specs=[
            pl.BlockSpec((tile_m, dim_in), lambda i: (i, 0)),  # x tile
            full(w0f), full(b0), full(w1f), full(b1), full(wout), full(bout),
        ],
        out_specs=pl.BlockSpec((tile_m, dop), lambda i: (i, 0)),
    )

    out = pl.pallas_call(
        kernel,
        out_shape=jax.ShapeDtypeStruct((Bp, dop), jnp.float32),
        grid_spec=grid_spec,
        compiler_params=pltpu.CompilerParams(
            dimension_semantics=("parallel",)),
    )(x, w0f, b0, w1f, b1, wout, bout)

    # strip batch padding and lane padding
    return out[:B, :dim_out]


def make_params(key, dim_in, dim_out, p, hidden=(200, 200)):
    k0 = max(1, int(p * dim_in))
    k1 = max(1, int(p * hidden[0]))
    keys = jax.random.split(key, 8)
    scale = 0.05
    params = {
        # dense sketch matrices (Gaussian sketch), one per SketchLinear
        "s0": jax.random.normal(keys[0], (dim_in, k0), jnp.float32) / jnp.sqrt(k0),
        "w0": scale * jax.random.normal(keys[1], (k0, hidden[0]), jnp.float32),
        "b0": scale * jax.random.normal(keys[2], (1, hidden[0]), jnp.float32),
        "s1": jax.random.normal(keys[3], (hidden[0], k1), jnp.float32) / jnp.sqrt(k1),
        "w1": scale * jax.random.normal(keys[4], (k1, hidden[1]), jnp.float32),
        "b1": scale * jax.random.normal(keys[5], (1, hidden[1]), jnp.float32),
        "w_out": scale * jax.random.normal(keys[6], (hidden[1], dim_out), jnp.float32),
        "b_out": scale * jax.random.normal(keys[7], (1, dim_out), jnp.float32),
    }
    return params


def reference_forward(x, params):
    # Exactly mirrors the PyTorch module: unfused sketches, double log_softmax.
    h = jnp.maximum(x @ params["s0"] @ params["w0"] + params["b0"], 0.0)
    h = (h @ params["s1"]) @ params["w1"] + params["b1"]
    h = jnp.maximum(h, 0.0)
    y = h @ params["w_out"] + params["b_out"]
    y = jax.nn.log_softmax(y, axis=1)
    y = jax.nn.log_softmax(y, axis=1)
    return y


if __name__ == "__main__":
    dim_in, dim_out, p = 32, 10, 0.5
    B = 16

    key = jax.random.PRNGKey(0)
    kx, kp = jax.random.split(key)
    # forward() does x.view(-1, dim_in); emulate by flattening a (B, 2, 16) input
    x_raw = jax.random.normal(kx, (B, 2, 16), jnp.float32)
    x = x_raw.reshape(-1, dim_in)

    params = make_params(kp, dim_in, dim_out, p)

    out = mlp_sketch_forward(x, params)
    out = jax.block_until_ready(out)

    ref = reference_forward(x, params)
    assert out.shape == (B, dim_out)
    assert jnp.allclose(out, ref, rtol=1e-5, atol=1e-5), "mismatch vs JAX reference"

    print("KERNEL_OK")
</pallas_src>

<mosaic_0001>
module attributes {stable_mosaic.version = 11 : i64} {
  func.func @mlp_sketch_kernel(%arg0: i32, %arg1: memref<16x32xf32, #tpu.memory_space<vmem>>, %arg2: memref<32x256xf32, #tpu.memory_space<vmem>>, %arg3: memref<1x256xf32, #tpu.memory_space<vmem>>, %arg4: memref<256x256xf32, #tpu.memory_space<vmem>>, %arg5: memref<1x256xf32, #tpu.memory_space<vmem>>, %arg6: memref<256x128xf32, #tpu.memory_space<vmem>>, %arg7: memref<1x128xf32, #tpu.memory_space<vmem>>, %arg8: memref<16x128xf32, #tpu.memory_space<vmem>>) attributes {dimension_semantics = [#tpu.dimension_semantics<parallel>], iteration_bounds = array<i64: 1>, scalar_prefetch = 0 : i64, scratch_operands = 0 : i64, tpu.core_type = #tpu.core_type<tc>, window_params = [{transform_indices = @transform_0, window_bounds = array<i64: 16, 32>}, {pipeline_mode = #tpu.pipeline_mode<synchronous>, transform_indices = @transform_1, window_bounds = array<i64: 32, 256>}, {pipeline_mode = #tpu.pipeline_mode<synchronous>, transform_indices = @transform_2, window_bounds = array<i64: 1, 256>}, {pipeline_mode = #tpu.pipeline_mode<synchronous>, transform_indices = @transform_3, window_bounds = array<i64: 256, 256>}, {pipeline_mode = #tpu.pipeline_mode<synchronous>, transform_indices = @transform_4, window_bounds = array<i64: 1, 256>}, {pipeline_mode = #tpu.pipeline_mode<synchronous>, transform_indices = @transform_5, window_bounds = array<i64: 256, 128>}, {pipeline_mode = #tpu.pipeline_mode<synchronous>, transform_indices = @transform_6, window_bounds = array<i64: 1, 128>}, {transform_indices = @transform_7, window_bounds = array<i64: 16, 128>}]} {
    %c0 = arith.constant 0 : index
    %c0_0 = arith.constant 0 : index
    %0 = vector.load %arg1[%c0, %c0_0] : memref<16x32xf32, #tpu.memory_space<vmem>>, vector<16x32xf32>
    %c0_1 = arith.constant 0 : index
    %c0_2 = arith.constant 0 : index
    %1 = vector.load %arg2[%c0_1, %c0_2] : memref<32x256xf32, #tpu.memory_space<vmem>>, vector<32x256xf32>
    %cst = arith.constant dense<0.000000e+00> : vector<16x256xf32>
    %2 = tpu.matmul %0, %1, %cst {dimension_numbers = #tpu.dot_dimension_numbers<[1], [0], [0], [1], [0, 0, 1, 1], [], []>} : vector<16x32xf32>, vector<32x256xf32>, vector<16x256xf32> -> vector<16x256xf32>
    %c0_3 = arith.constant 0 : index
    %c0_4 = arith.constant 0 : index
    %3 = vector.load %arg3[%c0_3, %c0_4] : memref<1x256xf32, #tpu.memory_space<vmem>>, vector<1x256xf32>
    %4 = vector.broadcast %3 : vector<1x256xf32> to vector<16x256xf32>
    %5 = arith.addf %2, %4 : vector<16x256xf32>
    %cst_5 = arith.constant 0.000000e+00 : f32
    %6 = vector.broadcast %cst_5 : f32 to vector<16x256xf32>
    %7 = arith.maximumf %5, %6 : vector<16x256xf32>
    %c0_6 = arith.constant 0 : index
    %c0_7 = arith.constant 0 : index
    %8 = vector.load %arg4[%c0_6, %c0_7] : memref<256x256xf32, #tpu.memory_space<vmem>>, vector<256x256xf32>
    %cst_8 = arith.constant dense<0.000000e+00> : vector<16x256xf32>
    %9 = tpu.matmul %7, %8, %cst_8 {dimension_numbers = #tpu.dot_dimension_numbers<[1], [0], [0], [1], [0, 0, 1, 1], [], []>} : vector<16x256xf32>, vector<256x256xf32>, vector<16x256xf32> -> vector<16x256xf32>
    %c0_9 = arith.constant 0 : index
    %c0_10 = arith.constant 0 : index
    %10 = vector.load %arg5[%c0_9, %c0_10] : memref<1x256xf32, #tpu.memory_space<vmem>>, vector<1x256xf32>
    %11 = vector.broadcast %10 : vector<1x256xf32> to vector<16x256xf32>
    %12 = arith.addf %9, %11 : vector<16x256xf32>
    %cst_11 = arith.constant 0.000000e+00 : f32
    %13 = vector.broadcast %cst_11 : f32 to vector<16x256xf32>
    %14 = arith.maximumf %12, %13 : vector<16x256xf32>
    %c0_12 = arith.constant 0 : index
    %c0_13 = arith.constant 0 : index
    %15 = vector.load %arg6[%c0_12, %c0_13] : memref<256x128xf32, #tpu.memory_space<vmem>>, vector<256x128xf32>
    %cst_14 = arith.constant dense<0.000000e+00> : vector<16x128xf32>
    %16 = tpu.matmul %14, %15, %cst_14 {dimension_numbers = #tpu.dot_dimension_numbers<[1], [0], [0], [1], [0, 0, 1, 1], [], []>} : vector<16x256xf32>, vector<256x128xf32>, vector<16x128xf32> -> vector<16x128xf32>
    %c0_15 = arith.constant 0 : index
    %c0_16 = arith.constant 0 : index
    %17 = vector.load %arg7[%c0_15, %c0_16] : memref<1x128xf32, #tpu.memory_space<vmem>>, vector<1x128xf32>
    %18 = vector.broadcast %17 : vector<1x128xf32> to vector<16x128xf32>
    %19 = arith.addf %16, %18 : vector<16x128xf32>
    %20 = tpu.iota {dimensions = array<i32: 1>} : vector<16x128xi32>
    %c10_i32 = arith.constant 10 : i32
    %21 = vector.broadcast %c10_i32 : i32 to vector<16x128xi32>
    %22 = arith.cmpi slt, %20, %21 : vector<16x128xi32>
    %cst_17 = arith.constant -1.000000e+30 : f32
    %23 = vector.broadcast %cst_17 : f32 to vector<16x128xf32>
    %24 = arith.select %22, %19, %23 : vector<16x128xi1>, vector<16x128xf32>
    %cst_18 = arith.constant dense<0xFF800000> : vector<16xf32>
    %25 = vector.multi_reduction <maximumf>, %24, %cst_18 [1] : vector<16x128xf32> to vector<16xf32>
    %26 = vector.shape_cast %25 : vector<16xf32> to vector<16x1xf32>
    %27 = vector.broadcast %26 : vector<16x1xf32> to vector<16x128xf32>
    %28 = arith.subf %24, %27 : vector<16x128xf32>
    %29 = math.exp %28 : vector<16x128xf32>
    %30 = vector.broadcast %26 : vector<16x1xf32> to vector<16x128xf32>
    %31 = arith.subf %24, %30 : vector<16x128xf32>
    %cst_19 = arith.constant dense<0.000000e+00> : vector<16xf32>
    %32 = vector.multi_reduction <add>, %29, %cst_19 [1] : vector<16x128xf32> to vector<16xf32>
    %33 = vector.shape_cast %32 : vector<16xf32> to vector<16x1xf32>
    %34 = math.log %33 : vector<16x1xf32>
    %35 = vector.broadcast %34 : vector<16x1xf32> to vector<16x128xf32>
    %36 = arith.subf %31, %35 : vector<16x128xf32>
    %c0_20 = arith.constant 0 : index
    %c0_21 = arith.constant 0 : index
    %37 = vector.load %arg8[%c0_20, %c0_21] : memref<16x128xf32, #tpu.memory_space<vmem>>, vector<16x128xf32>
    tpu.vector_store %arg8[%c0_20, %c0_21], %36 {strides = array<i32>} : memref<16x128xf32, #tpu.memory_space<vmem>>, vector<16x128xf32>,
    return
  }
  func.func @transform_0(%arg0: i32) -> (i32, i32) {
    %c0_i32 = arith.constant 0 : i32
    %c0_i32_0 = arith.constant 0 : i32
    return %arg0, %c0_i32 : i32, i32
  }
  func.func @transform_1(%arg0: i32) -> (i32, i32) {
    %c0_i32 = arith.constant 0 : i32
    %c0_i32_0 = arith.constant 0 : i32
    %c0_i32_1 = arith.constant 0 : i32
    return %c0_i32, %c0_i32_0 : i32, i32
  }
  func.func @transform_2(%arg0: i32) -> (i32, i32) {
    %c0_i32 = arith.constant 0 : i32
    %c0_i32_0 = arith.constant 0 : i32
    %c0_i32_1 = arith.constant 0 : i32
    return %c0_i32, %c0_i32_0 : i32, i32
  }
  func.func @transform_3(%arg0: i32) -> (i32, i32) {
    %c0_i32 = arith.constant 0 : i32
    %c0_i32_0 = arith.constant 0 : i32
    %c0_i32_1 = arith.constant 0 : i32
    return %c0_i32, %c0_i32_0 : i32, i32
  }
  func.func @transform_4(%arg0: i32) -> (i32, i32) {
    %c0_i32 = arith.constant 0 : i32
    %c0_i32_0 = arith.constant 0 : i32
    %c0_i32_1 = arith.constant 0 : i32
    return %c0_i32, %c0_i32_0 : i32, i32
  }
  func.func @transform_5(%arg0: i32) -> (i32, i32) {
    %c0_i32 = arith.constant 0 : i32
    %c0_i32_0 = arith.constant 0 : i32
    %c0_i32_1 = arith.constant 0 : i32
    return %c0_i32, %c0_i32_0 : i32, i32
  }
  func.func @transform_6(%arg0: i32) -> (i32, i32) {
    %c0_i32 = arith.constant 0 : i32
    %c0_i32_0 = arith.constant 0 : i32
    %c0_i32_1 = arith.constant 0 : i32
    return %c0_i32, %c0_i32_0 : i32, i32
  }
  func.func @transform_7(%arg0: i32) -> (i32, i32) {
    %c0_i32 = arith.constant 0 : i32
    %c0_i32_0 = arith.constant 0 : i32
    return %arg0, %c0_i32 : i32, i32
  }
}

</mosaic_0001>

<llo_original>
// kernel: tpu_custom_call.1
$region0: #{tpu_custom_call.1}
  #allocation0 [shape = 'u32[]', space=smem, size = 0x4, offset = 0x4, fixed_abs, tag = 'smem constant byte address 0x4 - core index']
  #allocation1 [shape = 'u32[144,128]{1,0:T(1,128)}', space=vmem, size = 0x12000, scoped, tag = 'internal scratch']
  %s0 = inlined_call_operand.hbm [shape: f32[16,32], index: 0, kind: input, shape index: {}]
  %s1 = inlined_call_operand.hbm [shape: f32[32,256], index: 1, kind: input, shape index: {}]
  %s2 = inlined_call_operand.vmem [shape: f32[1,256], index: 2, kind: input, shape index: {}]
  %s3 = inlined_call_operand.hbm [shape: f32[256,256], index: 3, kind: input, shape index: {}]
  %s4 = inlined_call_operand.vmem [shape: f32[1,256], index: 4, kind: input, shape index: {}]
  %s5 = inlined_call_operand.hbm [shape: f32[256,128], index: 5, kind: input, shape index: {}]
  %s6 = inlined_call_operand.vmem [shape: f32[1,128], index: 6, kind: input, shape index: {}]
  %s7 = inlined_call_operand.hbm [shape: f32[16,128], index: 7, kind: output, shape index: {}]
  %s8 = sld [smem:[#allocation0]]
  $region54: #{tpu_custom_call.1} parent=0
    _
  %s10 = ssub.s32 1, %s8
  %s11 = scalar_select 0, %s10, %s8
  $region1: #{tpu_custom_call.1} parent=0
    #allocation2 [shape = 'u8[8192]{0}', space=vmem, size = 0x2000, scoped, tag = 'input window, operand 0, single buffered']
    #allocation3 [shape = 's32[1]{0}', space=sflag, size = 0x4, scoped, tag = 'scoped memory for tpu_custom_call.1']
    #allocation4 [shape = 's32[1]{0}', space=sflag, size = 0x4, scoped, tag = 'scoped memory for tpu_custom_call.1']
    #allocation5 [shape = 'u8[32768]{0}', space=vmem, size = 0x8000, scoped, tag = 'input window, operand 1, single buffered']
    #allocation6 [shape = 's32[1]{0}', space=sflag, size = 0x4, scoped, tag = 'scoped memory for tpu_custom_call.1']
    #allocation7 [shape = 'u8[262144]{0}', space=vmem, size = 0x40000, scoped, tag = 'input window, operand 3, single buffered']
    #allocation8 [shape = 'u8[131072]{0}', space=vmem, size = 0x20000, scoped, tag = 'input window, operand 5, single buffered']
    #allocation9 [shape = 's32[1]{0}', space=sflag, size = 0x4, scoped, tag = 'scoped memory for tpu_custom_call.1']
    #allocation10 [shape = 'u8[8192]{0}', space=vmem, size = 0x2000, scoped, tag = 'output window, operand 0, single buffered']
    %12 = vsyncpa [#allocation3], 0
    %13 = vsyncpa [#allocation6], 0
    %14 = vsyncpa [#allocation9], 0
    %15 = vsyncpa [#allocation4], 0
    // Predicated region
    $region2: #{tpu_custom_call.1} parent=1 // pred_check
      _
    $region3: #{tpu_custom_call.1} parent=1 // pred_check_branch
      %17 = sbr.rel (0) target = $region5
    $region4: #{tpu_custom_call.1} parent=1 // pred_region
      %s19 = ssub.s32 256, 256
      %20 = vsyncadd [#allocation3], %s19
      %s21 = sshll.u32 [#allocation2], 4
      %s22 = int_to_ptr.vmem [resolvable:$true] %s21
      %27 = dma.hbm_to_vmem [thread:$0]  %s0, 256, %s22, [#allocation3], 128, 128, 8
    $region5: #{tpu_custom_call.1} parent=1 // pred_fallthru
      _
    // Predicated region
    $region6: #{tpu_custom_call.1} parent=1 // pred_check
      _
    $region7: #{tpu_custom_call.1} parent=1 // pred_check_branch
      %29 = sbr.rel (0) target = $region9
    $region8: #{tpu_custom_call.1} parent=1 // pred_region
      %s31 = ssub.s32 1024, 1024
      %32 = vsyncadd [#allocation6], %s31
      %s33 = sshll.u32 [#allocation5], 4
      %s34 = int_to_ptr.vmem [resolvable:$true] %s33
      %39 = dma.hbm_to_vmem [thread:$0]  %s1, 1024, %s34, [#allocation6], 256, 256, 16
    $region9: #{tpu_custom_call.1} parent=1 // pred_fallthru
      _
    // Predicated region
    $region10: #{tpu_custom_call.1} parent=1 // pred_check
      _
    $region11: #{tpu_custom_call.1} parent=1 // pred_check_branch
      %41 = sbr.rel (0) target = $region13
    $region12: #{tpu_custom_call.1} parent=1 // pred_region
      _
    $region13: #{tpu_custom_call.1} parent=1 // pred_fallthru
      _
    // Predicated region
    $region14: #{tpu_custom_call.1} parent=1 // pred_check
      _
    $region15: #{tpu_custom_call.1} parent=1 // pred_check_branch
      %43 = sbr.rel (0) target = $region17
    $region16: #{tpu_custom_call.1} parent=1 // pred_region
      %s45 = ssub.s32 8192, 8192
      %46 = vsyncadd [#allocation6], %s45
      %s47 = sshll.u32 [#allocation7], 4
      %s48 = int_to_ptr.vmem [resolvable:$true] %s47
      %53 = dma.hbm_to_vmem [thread:$0]  %s3, 8192, %s48, [#allocation6], 256, 256, 16
    $region17: #{tpu_custom_call.1} parent=1 // pred_fallthru
      _
    // Predicated region
    $region18: #{tpu_custom_call.1} parent=1 // pred_check
      _
    $region19: #{tpu_custom_call.1} parent=1 // pred_check_branch
      %55 = sbr.rel (0) target = $region21
    $region20: #{tpu_custom_call.1} parent=1 // pred_region
      _
    $region21: #{tpu_custom_call.1} parent=1 // pred_fallthru
      _
    // Predicated region
    $region22: #{tpu_custom_call.1} parent=1 // pred_check
      _
    $region23: #{tpu_custom_call.1} parent=1 // pred_check_branch
      %57 = sbr.rel (0) target = $region25
    $region24: #{tpu_custom_call.1} parent=1 // pred_region
      %s59 = ssub.s32 4096, 4096
      %60 = vsyncadd [#allocation9], %s59
      %s61 = sshll.u32 [#allocation8], 4
      %s62 = int_to_ptr.vmem [resolvable:$true] %s61
      %67 = dma.hbm_to_vmem [thread:$0]  %s5, 4096, %s62, [#allocation9], 128, 128, 8
    $region25: #{tpu_custom_call.1} parent=1 // pred_fallthru
      _
    // Predicated region
    $region26: #{tpu_custom_call.1} parent=1 // pred_check
      _
    $region27: #{tpu_custom_call.1} parent=1 // pred_check_branch
      %69 = sbr.rel (0) target = $region29
    $region28: #{tpu_custom_call.1} parent=1 // pred_region
      _
    $region29: #{tpu_custom_call.1} parent=1 // pred_fallthru
      _
    // Predicated region
    $region30: #{tpu_custom_call.1} parent=1 // pred_check
      _
    $region31: #{tpu_custom_call.1} parent=1 // pred_check_branch
      %71 = sbr.rel (0) target = $region33
    $region32: #{tpu_custom_call.1} parent=1 // pred_region
      %72 = dma.done [#allocation3], 256
    $region33: #{tpu_custom_call.1} parent=1 // pred_fallthru
      _
    // Predicated region
    $region34: #{tpu_custom_call.1} parent=1 // pred_check
      _
    $region35: #{tpu_custom_call.1} parent=1 // pred_check_branch
      %74 = sbr.rel (0) target = $region37
    $region36: #{tpu_custom_call.1} parent=1 // pred_region
      %75 = dma.done [#allocation6], 1024
    $region37: #{tpu_custom_call.1} parent=1 // pred_fallthru
      _
    // Predicated region
    $region38: #{tpu_custom_call.1} parent=1 // pred_check
      _
    $region39: #{tpu_custom_call.1} parent=1 // pred_check_branch
      %77 = sbr.rel (0) target = $region41
    $region40: #{tpu_custom_call.1} parent=1 // pred_region
      %78 = dma.done [#allocation6], 8192
    $region41: #{tpu_custom_call.1} parent=1 // pred_fallthru
      _
    // Predicated region
    $region42: #{tpu_custom_call.1} parent=1 // pred_check
      _
    $region43: #{tpu_custom_call.1} parent=1 // pred_check_branch
      %80 = sbr.rel (0) target = $region45
    $region44: #{tpu_custom_call.1} parent=1 // pred_region
      %81 = dma.done [#allocation9], 4096
    $region45: #{tpu_custom_call.1} parent=1 // pred_fallthru
      _
    %v82 = vld [vmem:[#allocation2] sm:$0xff]
    %v83 = vld [vmem:[#allocation2 + $0x8] sm:$0xff]
    %v84 = vld [vmem:[#allocation5] sm:$0xff]
    %v85 = vld [vmem:[#allocation5 + $0x8] sm:$0xff]
    %v86 = vld [vmem:[#allocation5 + $0x10] sm:$0xff]
    %v87 = vld [vmem:[#allocation5 + $0x18] sm:$0xff]
    %v88 = vld [vmem:[#allocation5 + $0x20] sm:$0xff]
    %v89 = vld [vmem:[#allocation5 + $0x28] sm:$0xff]
    %v90 = vld [vmem:[#allocation5 + $0x30] sm:$0xff]
    %v91 = vld [vmem:[#allocation5 + $0x38] sm:$0xff]
    %v92 = vld [vmem:[%s2] sm:$0x3]
    %v94 = vlaneseq
    %v95 = vshrl.u32 %v94, 7
    %v96 = vsub.s32 0, %v95
    %v97 = vrot.slane %v92, %v96
    %v98 = vlaneseq
    %v99 = vshrl.u32 %v98, 7
    %v100 = vsub.s32 1, %v99
    %v101 = vrot.slane %v92, %v100
    %vm104 = vcmask 261120
    %v106 = vsel %vm104, %v82, 0
    %v109 = vsel %vm104, %v83, 0
    %111 = vmatprep.subr.mxu0 %v85
    %112 = vmatpush1.msra.mxu0 %v84
    %113 = vmatprep.subr.mxu0 %v87
    %114 = vmatpush1.msra.mxu0 %v86
    %115 = vmatprep.subr.mxu0 %v89
    %116 = vmatpush1.msra.mxu0 %v88
    %117 = vmatprep.subr.mxu0 %v91
    %118 = vmatpush1.msra.mxu0 %v90
    %119 = vmatprep.subr.mxu0 0.0
    %120 = vmatpush1.msra.mxu0 0.0
    %121 = vmatprep.subr.mxu0 0.0
    %122 = vmatpush1.msra.mxu0 0.0
    %123 = vmatprep.subr.mxu0 0.0
    %124 = vmatpush1.msra.mxu0 0.0
    %125 = vmatprep.subr.mxu0 0.0
    %126 = vmatpush1.msra.mxu0 0.0
    %127 = vmatprep.subr.mxu0 0.0
    %128 = vmatpush1.msra.mxu0 0.0
    %129 = vmatprep.subr.mxu0 0.0
    %130 = vmatpush1.msra.mxu0 0.0
    %131 = vmatprep.subr.mxu0 0.0
    %132 = vmatpush1.msra.mxu0 0.0
    %133 = vmatprep.subr.mxu0 0.0
    %134 = vmatpush1.msra.mxu0 0.0
    %135 = vmatprep.subr.mxu0 0.0
    %136 = vmatpush1.msra.mxu0 0.0
    %137 = vmatprep.subr.mxu0 0.0
    %138 = vmatpush1.msra.mxu0 0.0
    %139 = vmatprep.subr.mxu0 0.0
    %140 = vmatpush1.msra.mxu0 0.0
    %141 = vmatprep.subr.mxu0 0.0
    %142 = vmatpush1.msra.mxu0 0.0
    %143 = vmatprep.subr.mxu0 0.0
    %144 = vmatpush1.msra.mxu0 0.0
    %145 = vmatprep.subr.mxu0 0.0
    %146 = vmatpush1.msra.mxu0 0.0
    %147 = vmatprep.subr.mxu0 0.0
    %148 = vmatpush1.msra.mxu0 0.0
    %149 = vmatprep.subr.mxu0 0.0
    %150 = vmatpush1.msra.mxu0 0.0
    %151 = vmatprep.subr.mxu0 0.0
    %152 = vmatpush1.msra.mxu0 0.0
    %153 = vmatprep.subr.mxu0 0.0
    %154 = vmatpush1.msra.mxu0 0.0
    %155 = vmatprep.subr.mxu0 0.0
    %156 = vmatpush1.msra.mxu0 0.0
    %157 = vmatprep.subr.mxu0 0.0
    %158 = vmatpush1.msra.mxu0 0.0
    %159 = vmatprep.subr.mxu0 0.0
    %160 = vmatpush1.msra.mxu0 0.0
    %161 = vmatprep.subr.mxu0 0.0
    %162 = vmatpush1.msra.mxu0 0.0
    %163 = vmatprep.subr.mxu0 0.0
    %164 = vmatpush1.msra.mxu0 0.0
    %165 = vmatprep.subr.mxu0 0.0
    %166 = vmatpush1.msra.mxu0 0.0
    %167 = vmatprep.subr.mxu0 0.0
    %168 = vmatpush1.msra.mxu0 0.0
    %169 = vmatprep.subr.mxu0 0.0
    %170 = vmatpush1.msra.mxu0 0.0
    %171 = vmatprep.subr.mxu0 0.0
    %172 = vmatpush1.msra.mxu0 0.0
    %173 = vmatprep.subr.mxu0 0.0
    %174 = vmatpush1.msra.mxu0 0.0
    %175 = vmatprep.mubr.f32.mxu0 0.0
    %176 = vmatmul.mubr.f32.gmra.mrb[0].mxu0 %v106
    %v177 = vpop.f32.mrb[0].mxu0
    %v178 = vadd.f32 %v97, %v177
    %v179 = vpop.f32.mrb[0].mxu0
    %v180 = vadd.f32 %v101, %v179
    %181 = vmatprep.mubr.f32.mxu0 0.0
    %182 = vmatmul.mubr.f32.gmra.mrb[0].mxu0 %v109
    %v183 = vpop.f32.mrb[0].mxu0
    %v184 = vadd.f32 %v97, %v183
    %v185 = vpop.f32.mrb[0].mxu0
    %v186 = vadd.f32 %v101, %v185
    %187 = vdwg.mxu0
    %v188 = vmax.f32 %v178, 0.0
    %v189 = vmax.f32 %v180, 0.0
    %v190 = vmax.f32 %v184, 0.0
    %v191 = vmax.f32 %v186, 0.0
    %v192 = vld [vmem:[#allocation7] sm:$0xff]
    %v193 = vld [vmem:[#allocation7 + $0x8] sm:$0xff]
    %v194 = vld [vmem:[#allocation7 + $0x10] sm:$0xff]
    %v195 = vld [vmem:[#allocation7 + $0x18] sm:$0xff]
    %v196 = vld [vmem:[#allocation7 + $0x20] sm:$0xff]
    %v197 = vld [vmem:[#allocation7 + $0x28] sm:$0xff]
    %v198 = vld [vmem:[#allocation7 + $0x30] sm:$0xff]
    %v199 = vld [vmem:[#allocation7 + $0x38] sm:$0xff]
    %v200 = vld [vmem:[#allocation7 + $0x40] sm:$0xff]
    %v201 = vld [vmem:[#allocation7 + $0x48] sm:$0xff]
    %v202 = vld [vmem:[#allocation7 + $0x50] sm:$0xff]
    %v203 = vld [vmem:[#allocation7 + $0x58] sm:$0xff]
    %v204 = vld [vmem:[#allocation7 + $0x60] sm:$0xff]
    %v205 = vld [vmem:[#allocation7 + $0x68] sm:$0xff]
    %v206 = vld [vmem:[#allocation7 + $0x70] sm:$0xff]
    %v207 = vld [vmem:[#allocation7 + $0x78] sm:$0xff]
    %v208 = vld [vmem:[#allocation7 + $0x80] sm:$0xff]
    %v209 = vld [vmem:[#allocation7 + $0x88] sm:$0xff]
    %v210 = vld [vmem:[#allocation7 + $0x90] sm:$0xff]
    %v211 = vld [vmem:[#allocation7 + $0x98] sm:$0xff]
    %v212 = vld [vmem:[#allocation7 + $0xa0] sm:$0xff]
    %v213 = vld [vmem:[#allocation7 + $0xa8] sm:$0xff]
    %v214 = vld [vmem:[#allocation7 + $0xb0] sm:$0xff]
    %v215 = vld [vmem:[#allocation7 + $0xb8] sm:$0xff]
    %v216 = vld [vmem:[#allocation7 + $0xc0] sm:$0xff]
    %v217 = vld [vmem:[#allocation7 + $0xc8] sm:$0xff]
    %v218 = vld [vmem:[#allocation7 + $0xd0] sm:$0xff]
    %v219 = vld [vmem:[#allocation7 + $0xd8] sm:$0xff]
    %v220 = vld [vmem:[#allocation7 + $0xe0] sm:$0xff]
    %v221 = vld [vmem:[#allocation7 + $0xe8] sm:$0xff]
    %v222 = vld [vmem:[#allocation7 + $0xf0] sm:$0xff]
    %v223 = vld [vmem:[#allocation7 + $0xf8] sm:$0xff]
    %v224 = vld [vmem:[#allocation7 + $0x100] sm:$0xff]
    %v225 = vld [vmem:[#allocation7 + $0x108] sm:$0xff]
    %v226 = vld [vmem:[#allocation7 + $0x110] sm:$0xff]
    %v227 = vld [vmem:[#allocation7 + $0x118] sm:$0xff]
    %v228 = vld [vmem:[#allocation7 + $0x120] sm:$0xff]
    %v229 = vld [vmem:[#allocation7 + $0x128] sm:$0xff]
    %v230 = vld [vmem:[#allocation7 + $0x130] sm:$0xff]
    %v231 = vld [vmem:[#allocation7 + $0x138] sm:$0xff]
    %v232 = vld [vmem:[#allocation7 + $0x140] sm:$0xff]
    %v233 = vld [vmem:[#allocation7 + $0x148] sm:$0xff]
    %v234 = vld [vmem:[#allocation7 + $0x150] sm:$0xff]
    %v235 = vld [vmem:[#allocation7 + $0x158] sm:$0xff]
    %v236 = vld [vmem:[#allocation7 + $0x160] sm:$0xff]
    %v237 = vld [vmem:[#allocation7 + $0x168] sm:$0xff]
    %v238 = vld [vmem:[#allocation7 + $0x170] sm:$0xff]
    %v239 = vld [vmem:[#allocation7 + $0x178] sm:$0xff]
    %v240 = vld [vmem:[#allocation7 + $0x180] sm:$0xff]
    %v241 = vld [vmem:[#allocation7 + $0x188] sm:$0xff]
    %v242 = vld [vmem:[#allocation7 + $0x190] sm:$0xff]
    %v243 = vld [vmem:[#allocation7 + $0x198] sm:$0xff]
    %v244 = vld [vmem:[#allocation7 + $0x1a0] sm:$0xff]
    %v245 = vld [vmem:[#allocation7 + $0x1a8] sm:$0xff]
    %v246 = vld [vmem:[#allocation7 + $0x1b0] sm:$0xff]
    %v247 = vld [vmem:[#allocation7 + $0x1b8] sm:$0xff]
    %v248 = vld [vmem:[#allocation7 + $0x1c0] sm:$0xff]
    %v249 = vld [vmem:[#allocation7 + $0x1c8] sm:$0xff]
    %v250 = vld [vmem:[#allocation7 + $0x1d0] sm:$0xff]
    %v251 = vld [vmem:[#allocation7 + $0x1d8] sm:$0xff]
    %v252 = vld [vmem:[#allocation7 + $0x1e0] sm:$0xff]
    %v253 = vld [vmem:[#allocation7 + $0x1e8] sm:$0xff]
    %v254 = vld [vmem:[#allocation7 + $0x1f0] sm:$0xff]
    %v255 = vld [vmem:[#allocation7 + $0x1f8] sm:$0xff]
    %v256 = vld [vmem:[%s4] sm:$0x3]
    %v258 = vlaneseq
    %v259 = vshrl.u32 %v258, 7
    %v260 = vsub.s32 0, %v259
    %v261 = vrot.slane %v256, %v260
    %v262 = vlaneseq
    %v263 = vshrl.u32 %v262, 7
    %v264 = vsub.s32 1, %v263
    %v265 = vrot.slane %v256, %v264
    %268 = vmatprep.subr.mxu0 %v193
    %269 = vmatpush1.msra.mxu0 %v192
    %270 = vmatprep.subr.mxu0 %v195
    %271 = vmatpush1.msra.mxu0 %v194
    %272 = vmatprep.subr.mxu0 %v197
    %273 = vmatpush1.msra.mxu0 %v196
    %274 = vmatprep.subr.mxu0 %v199
    %275 = vmatpush1.msra.mxu0 %v198
    %276 = vmatprep.subr.mxu0 %v201
    %277 = vmatpush1.msra.mxu0 %v200
    %278 = vmatprep.subr.mxu0 %v203
    %279 = vmatpush1.msra.mxu0 %v202
    %280 = vmatprep.subr.mxu0 %v205
    %281 = vmatpush1.msra.mxu0 %v204
    %282 = vmatprep.subr.mxu0 %v207
    %283 = vmatpush1.msra.mxu0 %v206
    %284 = vmatprep.subr.mxu0 %v209
    %285 = vmatpush1.msra.mxu0 %v208
    %286 = vmatprep.subr.mxu0 %v211
    %287 = vmatpush1.msra.mxu0 %v210
    %288 = vmatprep.subr.mxu0 %v213
    %289 = vmatpush1.msra.mxu0 %v212
    %290 = vmatprep.subr.mxu0 %v215
    %291 = vmatpush1.msra.mxu0 %v214
    %292 = vmatprep.subr.mxu0 %v217
    %293 = vmatpush1.msra.mxu0 %v216
    %294 = vmatprep.subr.mxu0 %v219
    %295 = vmatpush1.msra.mxu0 %v218
    %296 = vmatprep.subr.mxu0 %v221
    %297 = vmatpush1.msra.mxu0 %v220
    %298 = vmatprep.subr.mxu0 %v223
    %299 = vmatpush1.msra.mxu0 %v222
    %300 = vmatprep.subr.mxu0 %v225
    %301 = vmatpush1.msra.mxu0 %v224
    %302 = vmatprep.subr.mxu0 %v227
    %303 = vmatpush1.msra.mxu0 %v226
    %304 = vmatprep.subr.mxu0 %v229
    %305 = vmatpush1.msra.mxu0 %v228
    %306 = vmatprep.subr.mxu0 %v231
    %307 = vmatpush1.msra.mxu0 %v230
    %308 = vmatprep.subr.mxu0 %v233
    %309 = vmatpush1.msra.mxu0 %v232
    %310 = vmatprep.subr.mxu0 %v235
    %311 = vmatpush1.msra.mxu0 %v234
    %312 = vmatprep.subr.mxu0 %v237
    %313 = vmatpush1.msra.mxu0 %v236
    %314 = vmatprep.subr.mxu0 %v239
    %315 = vmatpush1.msra.mxu0 %v238
    %316 = vmatprep.subr.mxu0 %v241
    %317 = vmatpush1.msra.mxu0 %v240
    %318 = vmatprep.subr.mxu0 %v243
    %319 = vmatpush1.msra.mxu0 %v242
    %320 = vmatprep.subr.mxu0 %v245
    %321 = vmatpush1.msra.mxu0 %v244
    %322 = vmatprep.subr.mxu0 %v247
    %323 = vmatpush1.msra.mxu0 %v246
    %324 = vmatprep.subr.mxu0 %v249
    %325 = vmatpush1.msra.mxu0 %v248
    %326 = vmatprep.subr.mxu0 %v251
    %327 = vmatpush1.msra.mxu0 %v250
    %328 = vmatprep.subr.mxu0 %v253
    %329 = vmatpush1.msra.mxu0 %v252
    %330 = vmatprep.subr.mxu0 %v255
    %331 = vmatpush1.msra.mxu0 %v254
    %332 = vmatprep.mubr.f32.mxu0 %v189
    %333 = vmatmul.mubr.f32.gmra.mrb[0].mxu0 %v188
    %v334 = vpop.f32.mrb[0].mxu0
    %v335 = vadd.f32 %v261, %v334
    %v336 = vpop.f32.mrb[0].mxu0
    %v337 = vadd.f32 %v265, %v336
    %338 = vmatprep.mubr.f32.mxu0 %v191
    %339 = vmatmul.mubr.f32.gmra.mrb[0].mxu0 %v190
    %v340 = vpop.f32.mrb[0].mxu0
    %v341 = vadd.f32 %v261, %v340
    %v342 = vpop.f32.mrb[0].mxu0
    %v343 = vadd.f32 %v265, %v342
    %344 = vdwg.mxu0
    %v345 = vmax.f32 %v335, 0.0
    %v346 = vmax.f32 %v337, 0.0
    %v347 = vmax.f32 %v341, 0.0
    %v348 = vmax.f32 %v343, 0.0
    %v349 = vld [vmem:[#allocation8] sm:$0xff]
    %v350 = vld [vmem:[#allocation8 + $0x8] sm:$0xff]
    %v351 = vld [vmem:[#allocation8 + $0x10] sm:$0xff]
    %v352 = vld [vmem:[#allocation8 + $0x18] sm:$0xff]
    %v353 = vld [vmem:[#allocation8 + $0x20] sm:$0xff]
    %v354 = vld [vmem:[#allocation8 + $0x28] sm:$0xff]
    %v355 = vld [vmem:[#allocation8 + $0x30] sm:$0xff]
    %v356 = vld [vmem:[#allocation8 + $0x38] sm:$0xff]
    %v357 = vld [vmem:[#allocation8 + $0x40] sm:$0xff]
    %v358 = vld [vmem:[#allocation8 + $0x48] sm:$0xff]
    %v359 = vld [vmem:[#allocation8 + $0x50] sm:$0xff]
    %v360 = vld [vmem:[#allocation8 + $0x58] sm:$0xff]
    %v361 = vld [vmem:[#allocation8 + $0x60] sm:$0xff]
    %v362 = vld [vmem:[#allocation8 + $0x68] sm:$0xff]
    %v363 = vld [vmem:[#allocation8 + $0x70] sm:$0xff]
    %v364 = vld [vmem:[#allocation8 + $0x78] sm:$0xff]
    %v365 = vld [vmem:[#allocation8 + $0x80] sm:$0xff]
    %v366 = vld [vmem:[#allocation8 + $0x88] sm:$0xff]
    %v367 = vld [vmem:[#allocation8 + $0x90] sm:$0xff]
    %v368 = vld [vmem:[#allocation8 + $0x98] sm:$0xff]
    %v369 = vld [vmem:[#allocation8 + $0xa0] sm:$0xff]
    %v370 = vld [vmem:[#allocation8 + $0xa8] sm:$0xff]
    %v371 = vld [vmem:[#allocation8 + $0xb0] sm:$0xff]
    %v372 = vld [vmem:[#allocation8 + $0xb8] sm:$0xff]
    %v373 = vld [vmem:[#allocation8 + $0xc0] sm:$0xff]
    %v374 = vld [vmem:[#allocation8 + $0xc8] sm:$0xff]
    %v375 = vld [vmem:[#allocation8 + $0xd0] sm:$0xff]
    %v376 = vld [vmem:[#allocation8 + $0xd8] sm:$0xff]
    %v377 = vld [vmem:[#allocation8 + $0xe0] sm:$0xff]
    %v378 = vld [vmem:[#allocation8 + $0xe8] sm:$0xff]
    %v379 = vld [vmem:[#allocation8 + $0xf0] sm:$0xff]
    %v380 = vld [vmem:[#allocation8 + $0xf8] sm:$0xff]
    %v381 = vld [vmem:[%s6] sm:$0x1]
    %v383 = vlaneseq
    %v384 = vshrl.u32 %v383, 7
    %v385 = vsub.s32 0, %v384
    %v386 = vrot.slane %v381, %v385
    %388 = vmatprep.subr.mxu0 0.0
    %389 = vmatpush1.msra.mxu0 %v349
    %390 = vmatprep.subr.mxu0 0.0
    %391 = vmatpush1.msra.mxu0 %v350
    %392 = vmatprep.subr.mxu0 0.0
    %393 = vmatpush1.msra.mxu0 %v351
    %394 = vmatprep.subr.mxu0 0.0
    %395 = vmatpush1.msra.mxu0 %v352
    %396 = vmatprep.subr.mxu0 0.0
    %397 = vmatpush1.msra.mxu0 %v353
    %398 = vmatprep.subr.mxu0 0.0
    %399 = vmatpush1.msra.mxu0 %v354
    %400 = vmatprep.subr.mxu0 0.0
    %401 = vmatpush1.msra.mxu0 %v355
    %402 = vmatprep.subr.mxu0 0.0
    %403 = vmatpush1.msra.mxu0 %v356
    %404 = vmatprep.subr.mxu0 0.0
    %405 = vmatpush1.msra.mxu0 %v357
    %406 = vmatprep.subr.mxu0 0.0
    %407 = vmatpush1.msra.mxu0 %v358
    %408 = vmatprep.subr.mxu0 0.0
    %409 = vmatpush1.msra.mxu0 %v359
    %410 = vmatprep.subr.mxu0 0.0
    %411 = vmatpush1.msra.mxu0 %v360
    %412 = vmatprep.subr.mxu0 0.0
    %413 = vmatpush1.msra.mxu0 %v361
    %414 = vmatprep.subr.mxu0 0.0
    %415 = vmatpush1.msra.mxu0 %v362
    %416 = vmatprep.subr.mxu0 0.0
    %417 = vmatpush1.msra.mxu0 %v363
    %418 = vmatprep.subr.mxu0 0.0
    %419 = vmatpush1.msra.mxu0 %v364
    %420 = vmatprep.subr.mxu0 0.0
    %421 = vmatpush1.msra.mxu0 %v365
    %422 = vmatprep.subr.mxu0 0.0
    %423 = vmatpush1.msra.mxu0 %v366
    %424 = vmatprep.subr.mxu0 0.0
    %425 = vmatpush1.msra.mxu0 %v367
    %426 = vmatprep.subr.mxu0 0.0
    %427 = vmatpush1.msra.mxu0 %v368
    %428 = vmatprep.subr.mxu0 0.0
    %429 = vmatpush1.msra.mxu0 %v369
    %430 = vmatprep.subr.mxu0 0.0
    %431 = vmatpush1.msra.mxu0 %v370
    %432 = vmatprep.subr.mxu0 0.0
    %433 = vmatpush1.msra.mxu0 %v371
    %434 = vmatprep.subr.mxu0 0.0
    %435 = vmatpush1.msra.mxu0 %v372
    %436 = vmatprep.subr.mxu0 0.0
    %437 = vmatpush1.msra.mxu0 %v373
    %438 = vmatprep.subr.mxu0 0.0
    %439 = vmatpush1.msra.mxu0 %v374
    %440 = vmatprep.subr.mxu0 0.0
    %441 = vmatpush1.msra.mxu0 %v375
    %442 = vmatprep.subr.mxu0 0.0
    %443 = vmatpush1.msra.mxu0 %v376
    %444 = vmatprep.subr.mxu0 0.0
    %445 = vmatpush1.msra.mxu0 %v377
    %446 = vmatprep.subr.mxu0 0.0
    %447 = vmatpush1.msra.mxu0 %v378
    %448 = vmatprep.subr.mxu0 0.0
    %449 = vmatpush1.msra.mxu0 %v379
    %450 = vmatprep.subr.mxu0 0.0
    %451 = vmatpush1.msra.mxu0 %v380
    %452 = vmatprep.mubr.f32.mxu0 %v346
    %453 = vmatmul.mubr.f32.gmra.mrb[0].mxu0 %v345
    %v454 = vpop.f32.mrb[0].mxu0
    %v455 = vadd.f32 %v386, %v454
    %v456 = vpop.f32.mrb[0].mxu0
    %457 = vmatprep.mubr.f32.mxu0 %v348
    %458 = vmatmul.mubr.f32.gmra.mrb[0].mxu0 %v347
    %v459 = vpop.f32.mrb[0].mxu0
    %v460 = vadd.f32 %v386, %v459
    %v461 = vpop.f32.mrb[0].mxu0
    %462 = vdwg.mxu0
    %v463 = vlaneseq
    %v464 = vand.u32 %v463, 127
    %vm465 = vcmp.lt.s32.totalorder %v464, 10
    %v466 = vsel %vm465, %v455, -1e+30
    %v467 = vsel %vm465, %v460, -1e+30
    %468 = vmax.xlane.f32.xlu0 %v466
    %v469 = vpop.xlane.xlu0 %468
    %470 = vmax.xlane.f32.xlu0 %v467
    %v471 = vpop.xlane.xlu0 %470
    %v472 = vsub.f32 %v466, %v469
    %v473 = vsub.f32 %v467, %v471
    %v474 = vmul.f32 %v472, 1.442695
    %v475 = vpow.pop %v474
    %v476 = vmul.f32 %v473, 1.442695
    %v477 = vpow.pop %v476
    %478 = vadd.xlane.f32.xlu0 %v475
    %v479 = vpop.xlane.xlu0 %478
    %480 = vadd.xlane.f32.xlu0 %v477
    %v481 = vpop.xlane.xlu0 %480
    %v482 = vlog2.pop %v479
    %v483 = vmul.f32 %v482, 0.6931472
    %v484 = vlog2.pop %v481
    %v485 = vmul.f32 %v484, 0.6931472
    %v486 = vsub.f32 %v472, %v483
    %v487 = vsub.f32 %v473, %v485
    %488 = vst [vmem:[#allocation10] sm:$0xff] %v486
    %489 = vst [vmem:[#allocation10 + $0x8] sm:$0xff] %v487
    // Predicated region
    $region46: #{tpu_custom_call.1} parent=1 // pred_check
      _
    $region47: #{tpu_custom_call.1} parent=1 // pred_check_branch
      %491 = sbr.rel (0) target = $region49
    $region48: #{tpu_custom_call.1} parent=1 // pred_region
      %s493 = ssub.s32 256, 256
      %494 = vsyncadd [#allocation4], %s493
      %s495 = sshll.u32 [#allocation10], 4
      %s496 = int_to_ptr.vmem [resolvable:$true] %s495
      %501 = dma.vmem_to_hbm [thread:$0]  %s496, 256, %s7, [#allocation4], 128, 128, 8
    $region49: #{tpu_custom_call.1} parent=1 // pred_fallthru
      _
    // Predicated region
    $region50: #{tpu_custom_call.1} parent=1 // pred_check
      _
    $region51: #{tpu_custom_call.1} parent=1 // pred_check_branch
      %503 = sbr.rel (0) target = $region53
    $region52: #{tpu_custom_call.1} parent=1 // pred_region
      %504 = dma.done [#allocation4], 256
    $region53: #{tpu_custom_call.1} parent=1 // pred_fallthru
      _
    %505 = vsyncpa [#allocation3], 1
    %506 = vsyncpa [#allocation6], 1
    %507 = vsyncpa [#allocation9], 1
    %508 = vsyncpa [#allocation4], 1

</llo_original>
